<compile_context>
chip_gen: v6e
topology: v6e:2x2x1
jax: 0.10.0
libtpu: 0.0.40
codegen_flags: <defaults>
</compile_context>

<pallas_src>
import jax
import jax.numpy as jnp
from jax.experimental import pallas as pl
from jax.experimental.pallas import tpu as pltpu


def _round_up(x, m):
    return ((x + m - 1) // m) * m


def _vmem_cap_bytes():
    """Physical per-core VMEM minus headroom for compiler scratch."""
    try:
        phys = int(pltpu.get_tpu_info().vmem_capacity_bytes)
    except Exception:
        phys = 64 * 1024 * 1024  # conservative (v7x) fallback
    return phys - 8 * 1024 * 1024


def _const_spec(shape):
    """Spec for an operand whose block never changes across the grid.

    Single-buffered: the pipeliner would otherwise allocate a second, useless
    VMEM copy of a block that is DMA'd exactly once.
    """
    return pl.BlockSpec(shape, lambda i: (0, 0), pipeline_mode=pl.Buffered(1))


# ---------------------------------------------------------------------------
# Stage 1: row-tiled MLP  T = Linear2(ReLU(Linear1(Z))), emitted as bf16.
# ---------------------------------------------------------------------------
def _mlp_kernel(z_ref, w1_ref, b1_ref, w2_ref, b2_ref, t_ref):
    # bf16 operands into the MXU, f32 accumulation, f32 bias adds.
    h = jnp.dot(z_ref[...], w1_ref[...], preferred_element_type=jnp.float32)
    h = jnp.maximum(h + b1_ref[...], 0.0).astype(jnp.bfloat16)        # ReLU
    t = jnp.dot(h, w2_ref[...], preferred_element_type=jnp.float32) + b2_ref[...]
    t_ref[...] = t.astype(t_ref.dtype)                                # -> bf16


# ---------------------------------------------------------------------------
# Stage 2: per-query-row-tile similarity + numerically stable row softmax.
# The query tile is sliced out of the VMEM-resident T (no duplicate stream).
# ---------------------------------------------------------------------------
def _make_sim_softmax_kernel(n_valid, n_pad, tile):
    needs_mask = n_pad != n_valid

    def kernel(t_ref, out_ref):
        start = pl.multiple_of(pl.program_id(0) * tile, tile)
        q = t_ref[pl.ds(start, tile), :]                              # [tile, D] bf16
        # sim tile = q @ T^T with the transpose folded into the contraction
        # (dim 1 of both operands): bf16 operands feed the MXU directly,
        # f32 accumulation, no XLU transpose / VMEM temp.
        s = jax.lax.dot_general(
            q, t_ref[...],
            dimension_numbers=(((1,), (1,)), ((), ())),
            preferred_element_type=jnp.float32)                       # [tile, n_pad]

        if needs_mask:
            # Padded key columns must not contribute to the softmax denom.
            # (Mask in f32, after accumulation -- -1e30 would overflow bf16.)
            col = jax.lax.broadcasted_iota(jnp.int32, s.shape, 1)
            s = jnp.where(col < n_valid, s, jnp.float32(-1e30))

        # Row-wise softmax (dim=1), numerically stable; reciprocal on the EUP.
        m = jnp.max(s, axis=1, keepdims=True)
        e = jnp.exp(s - m)
        denom = jnp.sum(e, axis=1, keepdims=True)
        out_ref[...] = (e * pl.reciprocal(denom, approx=True)).astype(out_ref.dtype)

    return kernel


# ---------------------------------------------------------------------------
# Fused single-call path for tiny graphs (one row tile): MLP + sim + softmax.
# ---------------------------------------------------------------------------
def _make_fused_kernel(n_valid, n_pad):
    needs_mask = n_pad != n_valid

    def kernel(z_ref, w1_ref, b1_ref, w2_ref, b2_ref, out_ref):
        h = jnp.dot(z_ref[...], w1_ref[...], preferred_element_type=jnp.float32)
        h = jnp.maximum(h + b1_ref[...], 0.0).astype(jnp.bfloat16)
        t = (jnp.dot(h, w2_ref[...], preferred_element_type=jnp.float32)
             + b2_ref[...]).astype(jnp.bfloat16)
        s = jax.lax.dot_general(
            t, t,
            dimension_numbers=(((1,), (1,)), ((), ())),
            preferred_element_type=jnp.float32)                       # [n_pad, n_pad]
        if needs_mask:
            col = jax.lax.broadcasted_iota(jnp.int32, s.shape, 1)
            s = jnp.where(col < n_valid, s, jnp.float32(-1e30))
        m = jnp.max(s, axis=1, keepdims=True)
        e = jnp.exp(s - m)
        denom = jnp.sum(e, axis=1, keepdims=True)
        out_ref[...] = (e * pl.reciprocal(denom, approx=True)).astype(out_ref.dtype)

    return kernel


def diffusivity_transform(Z, W1, b1, W2, b2, out_dtype=jnp.bfloat16):
    """Z: [N, D] f32.  W1/W2: [D_in, D_out] (= PyTorch weight.T), b1/b2: [1, D].

    Returns softmax(T @ T.T, axis=1) with T = ReLU(Z @ W1 + b1) @ W2 + b2.
    Output dtype defaults to bf16 (Stage 2 is HBM-writeback bound); pass
    out_dtype=jnp.float32 to match the PyTorch dtype exactly.
    """
    N, D = Z.shape

    tile = 128                      # keeps both v7x TCs busy; K=D too small
    n_pad = _round_up(max(N, tile), tile)   # for the 256x256 MXU to matter.
    grid_rows = n_pad // tile
    out_bytes = jnp.dtype(out_dtype).itemsize

    z_pad = Z if n_pad == N else jnp.pad(Z, ((0, n_pad - N), (0, 0)))
    # bf16 operands for the MXU (f32 accumulation inside the kernels).
    z_bf16 = z_pad.astype(jnp.bfloat16)
    w1_bf16 = W1.astype(jnp.bfloat16)
    w2_bf16 = W2.astype(jnp.bfloat16)
    b1_f32 = b1.astype(jnp.float32)
    b2_f32 = b2.astype(jnp.float32)

    if grid_rows == 1:
        # ---- Tiny graph: one fused kernel, no HBM round trip of T ----
        out_pad = pl.pallas_call(
            _make_fused_kernel(N, n_pad),
            out_shape=jax.ShapeDtypeStruct((n_pad, n_pad), out_dtype),
            grid=(1,),
            in_specs=[
                pl.BlockSpec((n_pad, D), lambda i: (0, 0)),   # Z (padded)
                pl.BlockSpec((D, D), lambda i: (0, 0)),       # W1
                pl.BlockSpec((1, D), lambda i: (0, 0)),       # b1
                pl.BlockSpec((D, D), lambda i: (0, 0)),       # W2
                pl.BlockSpec((1, D), lambda i: (0, 0)),       # b2
            ],
            out_specs=pl.BlockSpec((n_pad, n_pad), lambda i: (0, 0)),
            cost_estimate=pl.CostEstimate(
                flops=4 * n_pad * D * D + 2 * n_pad * n_pad * D,
                transcendentals=n_pad * n_pad,
                bytes_accessed=n_pad * D * 2 + 2 * D * D * 2 + 2 * D * 4
                + n_pad * n_pad * out_bytes),
        )(z_bf16, w1_bf16, b1_f32, w2_bf16, b2_f32)
    else:
        # ---- Stage 1: MLP (row-parallel grid, weights single-buffered) ----
        t_bf16 = pl.pallas_call(
            _mlp_kernel,
            out_shape=jax.ShapeDtypeStruct((n_pad, D), jnp.bfloat16),
            grid=(grid_rows,),
            in_specs=[
                pl.BlockSpec((tile, D), lambda i: (i, 0)),    # Z rows (streamed)
                _const_spec((D, D)),                          # W1 (fetched once)
                _const_spec((1, D)),                          # b1
                _const_spec((D, D)),                          # W2
                _const_spec((1, D)),                          # b2
            ],
            out_specs=pl.BlockSpec((tile, D), lambda i: (i, 0)),
            compiler_params=pltpu.CompilerParams(
                dimension_semantics=("parallel",)),
            cost_estimate=pl.CostEstimate(
                flops=4 * n_pad * D * D,
                transcendentals=0,
                bytes_accessed=n_pad * D * 2 + 2 * D * D * 2 + 2 * D * 4
                + n_pad * D * 2),
        )(z_bf16, w1_bf16, b1_f32, w2_bf16, b2_f32)

        # ---- Stage 2: similarity + row softmax, query-row-parallel ----
        # Explicit VMEM budget: resident T (single-buffered) + output double
        # buffer + f32 softmax intermediates + slack; clamp below physical.
        needed = (n_pad * D * 2                      # resident T
                  + 2 * tile * n_pad * out_bytes     # output double buffer
                  + 2 * tile * n_pad * 4             # s / e f32 intermediates
                  + 4 * 1024 * 1024)                 # slack
        vmem_limit = min(max(needed, 16 * 1024 * 1024), _vmem_cap_bytes())

        out_pad = pl.pallas_call(
            _make_sim_softmax_kernel(N, n_pad, tile),
            out_shape=jax.ShapeDtypeStruct((n_pad, n_pad), out_dtype),
            grid=(grid_rows,),
            in_specs=[
                _const_spec((n_pad, D)),              # full T, resident, 1 DMA
            ],
            out_specs=pl.BlockSpec((tile, n_pad), lambda i: (i, 0)),
            compiler_params=pltpu.CompilerParams(
                dimension_semantics=("parallel",),
                vmem_limit_bytes=vmem_limit),
            cost_estimate=pl.CostEstimate(
                flops=2 * n_pad * n_pad * D + 5 * n_pad * n_pad,
                transcendentals=n_pad * n_pad,
                bytes_accessed=n_pad * D * 2 + n_pad * n_pad * out_bytes),
        )(t_bf16)

    if n_pad == N:
        return out_pad
    # Padded columns are exactly 0 after the -inf mask + softmax; the slice is
    # only needed to honor the [N, N] return contract for non-aligned N (a
    # consumer that tolerates padding should take out_pad directly — the slice
    # is an extra HBM copy).
    return out_pad[:N, :N]


def reference(Z, W1, b1, W2, b2):
    h = jnp.maximum(Z @ W1 + b1, 0.0)
    t = h @ W2 + b2
    sim = t @ t.T
    return jax.nn.softmax(sim, axis=1)


def _check(N, D, key):
    k_z, k_w1, k_b1, k_w2, k_b2 = jax.random.split(key, 5)
    Z = jax.random.normal(k_z, (N, D), dtype=jnp.float32)
    # Parameters stored as [D_in, D_out] (= PyTorch weight.T) so kernels do
    # x @ W + b; init range mirrors nn.Linear(D, D).
    scale = 1.0 / jnp.sqrt(jnp.float32(D))
    W1 = jax.random.uniform(k_w1, (D, D), jnp.float32, -scale, scale)
    b1 = jax.random.uniform(k_b1, (1, D), jnp.float32, -scale, scale)
    W2 = jax.random.uniform(k_w2, (D, D), jnp.float32, -scale, scale)
    b2 = jax.random.uniform(k_b2, (1, D), jnp.float32, -scale, scale)

    fn = jax.jit(diffusivity_transform)
    out = jax.block_until_ready(fn(Z, W1, b1, W2, b2))
    ref = reference(Z, W1, b1, W2, b2)

    assert out.shape == (N, N), f"bad shape {out.shape} for N={N}"
    out_f32 = out.astype(jnp.float32)
    # bf16 T/output + approx reciprocal -> loose tolerances vs f32 reference.
    assert jnp.allclose(out_f32, ref, atol=2e-2, rtol=5e-2), \
        f"mismatch vs reference for N={N}"
    assert jnp.allclose(jnp.sum(out_f32, axis=1), 1.0, atol=2e-2), \
        f"rows must sum to ~1 for N={N}"


if __name__ == "__main__":
    D = 32
    key = jax.random.PRNGKey(0)
    k_small, k_large = jax.random.split(key)

    # Tiny graph (fused single-kernel path), shape consistent with the module.
    _check(N=8, D=D, key=k_small)
    # Mid-size, non-128-aligned graph (two-stage tiled path: masking,
    # single-buffered resident T, in-kernel query slice, row-parallel grid).
    _check(N=160, D=D, key=k_large)

    print("KERNEL_OK")
</pallas_src>

<mosaic_0001>
module attributes {stable_mosaic.version = 11 : i64} {
  func.func @kernel(%arg0: i32, %arg1: memref<128x32xbf16, #tpu.memory_space<vmem>>, %arg2: memref<32x32xbf16, #tpu.memory_space<vmem>>, %arg3: memref<1x32xf32, #tpu.memory_space<vmem>>, %arg4: memref<32x32xbf16, #tpu.memory_space<vmem>>, %arg5: memref<1x32xf32, #tpu.memory_space<vmem>>, %arg6: memref<128x128xbf16, #tpu.memory_space<vmem>>) attributes {dimension_semantics = [#tpu.dimension_semantics<arbitrary>], iteration_bounds = array<i64: 1>, scalar_prefetch = 0 : i64, scratch_operands = 0 : i64, tpu.core_type = #tpu.core_type<tc>, window_params = [{pipeline_mode = #tpu.pipeline_mode<synchronous>, transform_indices = @transform_0, window_bounds = array<i64: 128, 32>}, {pipeline_mode = #tpu.pipeline_mode<synchronous>, transform_indices = @transform_1, window_bounds = array<i64: 32, 32>}, {pipeline_mode = #tpu.pipeline_mode<synchronous>, transform_indices = @transform_2, window_bounds = array<i64: 1, 32>}, {pipeline_mode = #tpu.pipeline_mode<synchronous>, transform_indices = @transform_3, window_bounds = array<i64: 32, 32>}, {pipeline_mode = #tpu.pipeline_mode<synchronous>, transform_indices = @transform_4, window_bounds = array<i64: 1, 32>}, {pipeline_mode = #tpu.pipeline_mode<synchronous>, transform_indices = @transform_5, window_bounds = array<i64: 128, 128>}]} {
    %c0 = arith.constant 0 : index
    %c0_0 = arith.constant 0 : index
    %0 = vector.load %arg1[%c0, %c0_0] : memref<128x32xbf16, #tpu.memory_space<vmem>>, vector<128x32xbf16>
    %c0_1 = arith.constant 0 : index
    %c0_2 = arith.constant 0 : index
    %1 = vector.load %arg2[%c0_1, %c0_2] : memref<32x32xbf16, #tpu.memory_space<vmem>>, vector<32x32xbf16>
    %cst = arith.constant dense<0.000000e+00> : vector<128x32xf32>
    %2 = tpu.matmul %0, %1, %cst {dimension_numbers = #tpu.dot_dimension_numbers<[1], [0], [0], [1], [0, 0, 1, 1], [], []>} : vector<128x32xbf16>, vector<32x32xbf16>, vector<128x32xf32> -> vector<128x32xf32>
    %c0_3 = arith.constant 0 : index
    %c0_4 = arith.constant 0 : index
    %3 = vector.load %arg3[%c0_3, %c0_4] : memref<1x32xf32, #tpu.memory_space<vmem>>, vector<1x32xf32>
    %4 = vector.broadcast %3 : vector<1x32xf32> to vector<128x32xf32>
    %5 = arith.addf %2, %4 : vector<128x32xf32>
    %cst_5 = arith.constant 0.000000e+00 : f32
    %6 = vector.broadcast %cst_5 : f32 to vector<128x32xf32>
    %7 = arith.maximumf %5, %6 : vector<128x32xf32>
    %8 = arith.truncf %7 : vector<128x32xf32> to vector<128x32xbf16>
    %c0_6 = arith.constant 0 : index
    %c0_7 = arith.constant 0 : index
    %9 = vector.load %arg4[%c0_6, %c0_7] : memref<32x32xbf16, #tpu.memory_space<vmem>>, vector<32x32xbf16>
    %cst_8 = arith.constant dense<0.000000e+00> : vector<128x32xf32>
    %10 = tpu.matmul %8, %9, %cst_8 {dimension_numbers = #tpu.dot_dimension_numbers<[1], [0], [0], [1], [0, 0, 1, 1], [], []>} : vector<128x32xbf16>, vector<32x32xbf16>, vector<128x32xf32> -> vector<128x32xf32>
    %c0_9 = arith.constant 0 : index
    %c0_10 = arith.constant 0 : index
    %11 = vector.load %arg5[%c0_9, %c0_10] : memref<1x32xf32, #tpu.memory_space<vmem>>, vector<1x32xf32>
    %12 = vector.broadcast %11 : vector<1x32xf32> to vector<128x32xf32>
    %13 = arith.addf %10, %12 : vector<128x32xf32>
    %14 = arith.truncf %13 : vector<128x32xf32> to vector<128x32xbf16>
    %cst_11 = arith.constant dense<0.000000e+00> : vector<128x128xf32>
    %15 = tpu.matmul %14, %14, %cst_11 {dimension_numbers = #tpu.dot_dimension_numbers<[1], [1], [0], [0], [0, 0, 1, 0], [], []>} : vector<128x32xbf16>, vector<128x32xbf16>, vector<128x128xf32> -> vector<128x128xf32>
    %16 = tpu.iota {dimensions = array<i32: 1>} : vector<128x128xi32>
    %c8_i32 = arith.constant 8 : i32
    %17 = vector.broadcast %c8_i32 : i32 to vector<128x128xi32>
    %18 = arith.cmpi slt, %16, %17 : vector<128x128xi32>
    %cst_12 = arith.constant -1.000000e+30 : f32
    %19 = vector.broadcast %cst_12 : f32 to vector<128x128xf32>
    %20 = arith.select %18, %15, %19 : vector<128x128xi1>, vector<128x128xf32>
    %cst_13 = arith.constant dense<0xFF800000> : vector<128xf32>
    %21 = vector.multi_reduction <maximumf>, %20, %cst_13 [1] : vector<128x128xf32> to vector<128xf32>
    %22 = vector.shape_cast %21 : vector<128xf32> to vector<128x1xf32>
    %23 = vector.broadcast %22 : vector<128x1xf32> to vector<128x128xf32>
    %24 = arith.subf %20, %23 : vector<128x128xf32>
    %25 = math.exp %24 : vector<128x128xf32>
    %cst_14 = arith.constant dense<0.000000e+00> : vector<128xf32>
    %26 = vector.multi_reduction <add>, %25, %cst_14 [1] : vector<128x128xf32> to vector<128xf32>
    %27 = vector.shape_cast %26 : vector<128xf32> to vector<128x1xf32>
    %28 = tpu.reciprocal %27 {approx = true} : vector<128x1xf32> -> vector<128x1xf32>
    %29 = vector.broadcast %28 : vector<128x1xf32> to vector<128x128xf32>
    %30 = arith.mulf %25, %29 : vector<128x128xf32>
    %31 = arith.truncf %30 : vector<128x128xf32> to vector<128x128xbf16>
    %c0_15 = arith.constant 0 : index
    %c0_16 = arith.constant 0 : index
    %32 = vector.load %arg6[%c0_15, %c0_16] : memref<128x128xbf16, #tpu.memory_space<vmem>>, vector<128x128xbf16>
    tpu.vector_store %arg6[%c0_15, %c0_16], %31 {strides = array<i32>} : memref<128x128xbf16, #tpu.memory_space<vmem>>, vector<128x128xbf16>,
    return
  }
  func.func @transform_0(%arg0: i32) -> (i32, i32) {
    %c0_i32 = arith.constant 0 : i32
    %c0_i32_0 = arith.constant 0 : i32
    %c0_i32_1 = arith.constant 0 : i32
    return %c0_i32, %c0_i32_0 : i32, i32
  }
  func.func @transform_1(%arg0: i32) -> (i32, i32) {
    %c0_i32 = arith.constant 0 : i32
    %c0_i32_0 = arith.constant 0 : i32
    %c0_i32_1 = arith.constant 0 : i32
    return %c0_i32, %c0_i32_0 : i32, i32
  }
  func.func @transform_2(%arg0: i32) -> (i32, i32) {
    %c0_i32 = arith.constant 0 : i32
    %c0_i32_0 = arith.constant 0 : i32
    %c0_i32_1 = arith.constant 0 : i32
    return %c0_i32, %c0_i32_0 : i32, i32
  }
  func.func @transform_3(%arg0: i32) -> (i32, i32) {
    %c0_i32 = arith.constant 0 : i32
    %c0_i32_0 = arith.constant 0 : i32
    %c0_i32_1 = arith.constant 0 : i32
    return %c0_i32, %c0_i32_0 : i32, i32
  }
  func.func @transform_4(%arg0: i32) -> (i32, i32) {
    %c0_i32 = arith.constant 0 : i32
    %c0_i32_0 = arith.constant 0 : i32
    %c0_i32_1 = arith.constant 0 : i32
    return %c0_i32, %c0_i32_0 : i32, i32
  }
  func.func @transform_5(%arg0: i32) -> (i32, i32) {
    %c0_i32 = arith.constant 0 : i32
    %c0_i32_0 = arith.constant 0 : i32
    %c0_i32_1 = arith.constant 0 : i32
    return %c0_i32, %c0_i32_0 : i32, i32
  }
}

</mosaic_0001>

<llo_original>
// kernel: diffusivity_transform.1
$region0: #{diffusivity_transform.1}
  #allocation0 [shape = 'u32[]', space=smem, size = 0x4, offset = 0x4, fixed_abs, tag = 'smem constant byte address 0x4 - core index']
  #allocation1 [shape = 'u32[144,128]{1,0:T(1,128)}', space=vmem, size = 0x12000, scoped, tag = 'internal scratch']
  %s0 = inlined_call_operand.vmem [shape: bf16[128,32], index: 0, kind: input, shape index: {}]
  %s1 = inlined_call_operand.vmem [shape: bf16[32,32], index: 1, kind: input, shape index: {}]
  %s2 = inlined_call_operand.vmem [shape: f32[1,32], index: 2, kind: input, shape index: {}]
  %s3 = inlined_call_operand.vmem [shape: bf16[32,32], index: 3, kind: input, shape index: {}]
  %s4 = inlined_call_operand.vmem [shape: f32[1,32], index: 4, kind: input, shape index: {}]
  %s5 = inlined_call_operand.vmem [shape: bf16[128,128], index: 5, kind: output, shape index: {}]
  %s6 = sld [smem:[#allocation0]]
  $region30: #{diffusivity_transform.1} parent=0
    _
  %s8 = ssub.s32 1, %s6
  %s9 = scalar_select 0, %s8, %s6
  // Predicated region
  $region2: #{diffusivity_transform.1} parent=0 // pred_check
    _
  $region3: #{diffusivity_transform.1} parent=0 // pred_check_branch
    %11 = sbr.rel (0) target = $region5
  $region4: #{diffusivity_transform.1} parent=0 // pred_region
    _
  $region5: #{diffusivity_transform.1} parent=0 // pred_fallthru
    _
  // Predicated region
  $region6: #{diffusivity_transform.1} parent=0 // pred_check
    _
  $region7: #{diffusivity_transform.1} parent=0 // pred_check_branch
    %13 = sbr.rel (0) target = $region9
  $region8: #{diffusivity_transform.1} parent=0 // pred_region
    _
  $region9: #{diffusivity_transform.1} parent=0 // pred_fallthru
    _
  // Predicated region
  $region10: #{diffusivity_transform.1} parent=0 // pred_check
    _
  $region11: #{diffusivity_transform.1} parent=0 // pred_check_branch
    %15 = sbr.rel (0) target = $region13
  $region12: #{diffusivity_transform.1} parent=0 // pred_region
    _
  $region13: #{diffusivity_transform.1} parent=0 // pred_fallthru
    _
  // Predicated region
  $region14: #{diffusivity_transform.1} parent=0 // pred_check
    _
  $region15: #{diffusivity_transform.1} parent=0 // pred_check_branch
    %17 = sbr.rel (0) target = $region17
  $region16: #{diffusivity_transform.1} parent=0 // pred_region
    _
  $region17: #{diffusivity_transform.1} parent=0 // pred_fallthru
    _
  // Predicated region
  $region18: #{diffusivity_transform.1} parent=0 // pred_check
    _
  $region19: #{diffusivity_transform.1} parent=0 // pred_check_branch
    %19 = sbr.rel (0) target = $region21
  $region20: #{diffusivity_transform.1} parent=0 // pred_region
    _
  $region21: #{diffusivity_transform.1} parent=0 // pred_fallthru
    _
  %v21 = vld [vmem:[%s0] sm:$0xf]
  %v22 = vld [vmem:[%s0 + $0x4] sm:$0xf]
  %v23 = vld [vmem:[%s0 + $0x8] sm:$0xf]
  %v24 = vld [vmem:[%s0 + $0xc] sm:$0xf]
  %v25 = vld [vmem:[%s0 + $0x10] sm:$0xf]
  %v26 = vld [vmem:[%s0 + $0x14] sm:$0xf]
  %v27 = vld [vmem:[%s0 + $0x18] sm:$0xf]
  %v28 = vld [vmem:[%s0 + $0x1c] sm:$0xf]
  %v29 = vld [vmem:[%s0 + $0x20] sm:$0xf]
  %v30 = vld [vmem:[%s0 + $0x24] sm:$0xf]
  %v31 = vld [vmem:[%s0 + $0x28] sm:$0xf]
  %v32 = vld [vmem:[%s0 + $0x2c] sm:$0xf]
  %v33 = vld [vmem:[%s0 + $0x30] sm:$0xf]
  %v34 = vld [vmem:[%s0 + $0x34] sm:$0xf]
  %v35 = vld [vmem:[%s0 + $0x38] sm:$0xf]
  %v36 = vld [vmem:[%s0 + $0x3c] sm:$0xf]
  %v37 = vld [vmem:[%s1] sm:$0xf]
  %v38 = vld [vmem:[%s1 + $0x4] sm:$0xf]
  %v39 = vld [vmem:[%s1 + $0x8] sm:$0xf]
  %v40 = vld [vmem:[%s1 + $0xc] sm:$0xf]
  %v41 = vld [vmem:[%s2] sm:$0x1]
  %v43 = vlaneseq
  %v44 = vshrl.u32 %v43, 7
  %v45 = vsub.s32 0, %v44
  %v46 = vrot.slane %v41, %v45
  %v64 = vunpack.c.l.b16 %v21
  %v65 = vunpack.c.l.b16 %v22
  %v66 = vunpack.c.l.b16 %v23
  %v67 = vunpack.c.l.b16 %v24
  %v68 = vunpack.c.l.b16 %v25
  %v69 = vunpack.c.l.b16 %v26
  %v70 = vunpack.c.l.b16 %v27
  %v71 = vunpack.c.l.b16 %v28
  %v72 = vunpack.c.l.b16 %v29
  %v73 = vunpack.c.l.b16 %v30
  %v74 = vunpack.c.l.b16 %v31
  %v75 = vunpack.c.l.b16 %v32
  %v76 = vunpack.c.l.b16 %v33
  %v77 = vunpack.c.l.b16 %v34
  %v78 = vunpack.c.l.b16 %v35
  %v79 = vunpack.c.l.b16 %v36
  %v80 = vpack.c.b16 %v65, %v64
  %v81 = vpack.c.b16 %v67, %v66
  %v82 = vpack.c.b16 %v69, %v68
  %v83 = vpack.c.b16 %v71, %v70
  %v84 = vpack.c.b16 %v73, %v72
  %v85 = vpack.c.b16 %v75, %v74
  %v86 = vpack.c.b16 %v77, %v76
  %v87 = vpack.c.b16 %v79, %v78
  %v92 = vunpack.c.l.b16 %v37
  %v93 = vunpack.c.l.b16 %v38
  %v94 = vunpack.c.l.b16 %v39
  %v95 = vunpack.c.l.b16 %v40
  %v96 = vpack.c.b16 %v93, %v92
  %v97 = vpack.c.b16 %v95, %v94
  %vm100 = vcmask 261120
  %v102 = vsel %vm100, %v80, 0
  %v105 = vsel %vm100, %v81, 0
  %v108 = vsel %vm100, %v82, 0
  %v111 = vsel %vm100, %v83, 0
  %v114 = vsel %vm100, %v84, 0
  %v117 = vsel %vm100, %v85, 0
  %v120 = vsel %vm100, %v86, 0
  %v123 = vsel %vm100, %v87, 0
  %125 = vmatprep.subr.bf16.mxu0 0
  %126 = vmatpush1.bf16.msra.mxu0 0
  %127 = vmatprep.subr.bf16.mxu0 0
  %128 = vmatpush1.bf16.msra.mxu0 0
  %129 = vmatprep.subr.bf16.mxu0 0
  %130 = vmatpush1.bf16.msra.mxu0 0
  %131 = vmatprep.subr.bf16.mxu0 0
  %132 = vmatpush1.bf16.msra.mxu0 0
  %133 = vmatprep.subr.bf16.mxu0 0
  %134 = vmatpush1.bf16.msra.mxu0 0
  %135 = vmatprep.subr.bf16.mxu0 0
  %136 = vmatpush1.bf16.msra.mxu0 0
  %137 = vmatprep.subr.bf16.mxu0 0
  %138 = vmatpush1.bf16.msra.mxu0 %v97
  %139 = vmatprep.subr.bf16.mxu0 0
  %140 = vmatpush1.bf16.msra.mxu0 %v96
  %141 = vmatprep.subr.bf16.mxu0 0
  %142 = vmatpush2.bf16.msra.mxu0 0
  %143 = vmatprep.subr.bf16.mxu0 0
  %144 = vmatpush2.bf16.msra.mxu0 0
  %145 = vmatprep.subr.bf16.mxu0 0
  %146 = vmatpush2.bf16.msra.mxu0 0
  %147 = vmatprep.subr.bf16.mxu0 0
  %148 = vmatpush2.bf16.msra.mxu0 0
  %149 = vmatprep.subr.bf16.mxu0 0
  %150 = vmatpush2.bf16.msra.mxu0 0
  %151 = vmatprep.subr.bf16.mxu0 0
  %152 = vmatpush2.bf16.msra.mxu0 0
  %153 = vmatprep.subr.bf16.mxu0 0
  %154 = vmatpush2.bf16.msra.mxu0 0
  %155 = vmatprep.subr.bf16.mxu0 0
  %156 = vmatpush2.bf16.msra.mxu0 0
  %157 = vmatprep.mubr.bf16.mxu0 0
  %158 = vmatmul.mubr.bf16.gmra.mxu0 %v102
  %v159 = vpop.f32.mrf.mxu0
  %v160 = vadd.f32 %v46, %v159
  %v161 = vpop.f32.mrf.mxu0
  %v162 = vpop.f32.mrf.mxu0
  %v163 = vadd.f32 %v46, %v162
  %v164 = vpop.f32.mrf.mxu0
  %165 = vmatprep.mubr.bf16.mxu0 0
  %166 = vmatmul.mubr.bf16.gmra.mxu0 %v105
  %v167 = vpop.f32.mrf.mxu0
  %v168 = vadd.f32 %v46, %v167
  %v169 = vpop.f32.mrf.mxu0
  %v170 = vpop.f32.mrf.mxu0
  %v171 = vadd.f32 %v46, %v170
  %v172 = vpop.f32.mrf.mxu0
  %173 = vmatprep.mubr.bf16.mxu0 0
  %174 = vmatmul.mubr.bf16.gmra.mxu0 %v108
  %v175 = vpop.f32.mrf.mxu0
  %v176 = vadd.f32 %v46, %v175
  %v177 = vpop.f32.mrf.mxu0
  %v178 = vpop.f32.mrf.mxu0
  %v179 = vadd.f32 %v46, %v178
  %v180 = vpop.f32.mrf.mxu0
  %181 = vmatprep.mubr.bf16.mxu0 0
  %182 = vmatmul.mubr.bf16.gmra.mxu0 %v111
  %v183 = vpop.f32.mrf.mxu0
  %v184 = vadd.f32 %v46, %v183
  %v185 = vpop.f32.mrf.mxu0
  %v186 = vpop.f32.mrf.mxu0
  %v187 = vadd.f32 %v46, %v186
  %v188 = vpop.f32.mrf.mxu0
  %189 = vmatprep.mubr.bf16.mxu0 0
  %190 = vmatmul.mubr.bf16.gmra.mxu0 %v114
  %v191 = vpop.f32.mrf.mxu0
  %v192 = vadd.f32 %v46, %v191
  %v193 = vpop.f32.mrf.mxu0
  %v194 = vpop.f32.mrf.mxu0
  %v195 = vadd.f32 %v46, %v194
  %v196 = vpop.f32.mrf.mxu0
  %197 = vmatprep.mubr.bf16.mxu0 0
  %198 = vmatmul.mubr.bf16.gmra.mxu0 %v117
  %v199 = vpop.f32.mrf.mxu0
  %v200 = vadd.f32 %v46, %v199
  %v201 = vpop.f32.mrf.mxu0
  %v202 = vpop.f32.mrf.mxu0
  %v203 = vadd.f32 %v46, %v202
  %v204 = vpop.f32.mrf.mxu0
  %205 = vmatprep.mubr.bf16.mxu0 0
  %206 = vmatmul.mubr.bf16.gmra.mxu0 %v120
  %v207 = vpop.f32.mrf.mxu0
  %v208 = vadd.f32 %v46, %v207
  %v209 = vpop.f32.mrf.mxu0
  %v210 = vpop.f32.mrf.mxu0
  %v211 = vadd.f32 %v46, %v210
  %v212 = vpop.f32.mrf.mxu0
  %213 = vmatprep.mubr.bf16.mxu0 0
  %214 = vmatmul.mubr.bf16.gmra.mxu0 %v123
  %v215 = vpop.f32.mrf.mxu0
  %v216 = vadd.f32 %v46, %v215
  %v217 = vpop.f32.mrf.mxu0
  %v218 = vpop.f32.mrf.mxu0
  %v219 = vadd.f32 %v46, %v218
  %v220 = vpop.f32.mrf.mxu0
  %221 = vdwg.mxu0
  %v222 = vmax.f32 %v160, 0.0
  %v223 = vmax.f32 %v163, 0.0
  %v224 = vmax.f32 %v168, 0.0
  %v225 = vmax.f32 %v171, 0.0
  %v226 = vmax.f32 %v176, 0.0
  %v227 = vmax.f32 %v179, 0.0
  %v228 = vmax.f32 %v184, 0.0
  %v229 = vmax.f32 %v187, 0.0
  %v230 = vmax.f32 %v192, 0.0
  %v231 = vmax.f32 %v195, 0.0
  %v232 = vmax.f32 %v200, 0.0
  %v233 = vmax.f32 %v203, 0.0
  %v234 = vmax.f32 %v208, 0.0
  %v235 = vmax.f32 %v211, 0.0
  %v236 = vmax.f32 %v216, 0.0
  %v237 = vmax.f32 %v219, 0.0
  %v238 = vpack.c.bf16 %v223, %v222
  %v239 = vpack.c.bf16 %v225, %v224
  %v240 = vpack.c.bf16 %v227, %v226
  %v241 = vpack.c.bf16 %v229, %v228
  %v242 = vpack.c.bf16 %v231, %v230
  %v243 = vpack.c.bf16 %v233, %v232
  %v244 = vpack.c.bf16 %v235, %v234
  %v245 = vpack.c.bf16 %v237, %v236
  %v246 = vld [vmem:[%s3] sm:$0xf]
  %v247 = vld [vmem:[%s3 + $0x4] sm:$0xf]
  %v248 = vld [vmem:[%s3 + $0x8] sm:$0xf]
  %v249 = vld [vmem:[%s3 + $0xc] sm:$0xf]
  %v250 = vld [vmem:[%s4] sm:$0x1]
  %v252 = vlaneseq
  %v253 = vshrl.u32 %v252, 7
  %v254 = vsub.s32 0, %v253
  %v255 = vrot.slane %v250, %v254
  %v261 = vunpack.c.l.b16 %v246
  %v262 = vunpack.c.l.b16 %v247
  %v263 = vunpack.c.l.b16 %v248
  %v264 = vunpack.c.l.b16 %v249
  %v265 = vpack.c.b16 %v262, %v261
  %v266 = vpack.c.b16 %v264, %v263
  %v270 = vsel %vm100, %v238, 0
  %v273 = vsel %vm100, %v239, 0
  %v276 = vsel %vm100, %v240, 0
  %v279 = vsel %vm100, %v241, 0
  %v282 = vsel %vm100, %v242, 0
  %v285 = vsel %vm100, %v243, 0
  %v288 = vsel %vm100, %v244, 0
  %v291 = vsel %vm100, %v245, 0
  %293 = vmatprep.subr.bf16.mxu0 0
  %294 = vmatpush1.bf16.msra.mxu0 0
  %295 = vmatprep.subr.bf16.mxu0 0
  %296 = vmatpush1.bf16.msra.mxu0 0
  %297 = vmatprep.subr.bf16.mxu0 0
  %298 = vmatpush1.bf16.msra.mxu0 0
  %299 = vmatprep.subr.bf16.mxu0 0
  %300 = vmatpush1.bf16.msra.mxu0 0
  %301 = vmatprep.subr.bf16.mxu0 0
  %302 = vmatpush1.bf16.msra.mxu0 0
  %303 = vmatprep.subr.bf16.mxu0 0
  %304 = vmatpush1.bf16.msra.mxu0 0
  %305 = vmatprep.subr.bf16.mxu0 0
  %306 = vmatpush1.bf16.msra.mxu0 %v266
  %307 = vmatprep.subr.bf16.mxu0 0
  %308 = vmatpush1.bf16.msra.mxu0 %v265
  %309 = vmatprep.subr.bf16.mxu0 0
  %310 = vmatpush2.bf16.msra.mxu0 0
  %311 = vmatprep.subr.bf16.mxu0 0
  %312 = vmatpush2.bf16.msra.mxu0 0
  %313 = vmatprep.subr.bf16.mxu0 0
  %314 = vmatpush2.bf16.msra.mxu0 0
  %315 = vmatprep.subr.bf16.mxu0 0
  %316 = vmatpush2.bf16.msra.mxu0 0
  %317 = vmatprep.subr.bf16.mxu0 0
  %318 = vmatpush2.bf16.msra.mxu0 0
  %319 = vmatprep.subr.bf16.mxu0 0
  %320 = vmatpush2.bf16.msra.mxu0 0
  %321 = vmatprep.subr.bf16.mxu0 0
  %322 = vmatpush2.bf16.msra.mxu0 0
  %323 = vmatprep.subr.bf16.mxu0 0
  %324 = vmatpush2.bf16.msra.mxu0 0
  %325 = vmatprep.mubr.bf16.mxu0 0
  %326 = vmatmul.mubr.bf16.gmra.mxu0 %v270
  %v327 = vpop.f32.mrf.mxu0
  %v328 = vadd.f32 %v255, %v327
  %v329 = vpop.f32.mrf.mxu0
  %v330 = vpop.f32.mrf.mxu0
  %v331 = vadd.f32 %v255, %v330
  %v332 = vpop.f32.mrf.mxu0
  %333 = vmatprep.mubr.bf16.mxu0 0
  %334 = vmatmul.mubr.bf16.gmra.mxu0 %v273
  %v335 = vpop.f32.mrf.mxu0
  %v336 = vadd.f32 %v255, %v335
  %v337 = vpop.f32.mrf.mxu0
  %v338 = vpop.f32.mrf.mxu0
  %v339 = vadd.f32 %v255, %v338
  %v340 = vpop.f32.mrf.mxu0
  %341 = vmatprep.mubr.bf16.mxu0 0
  %342 = vmatmul.mubr.bf16.gmra.mxu0 %v276
  %v343 = vpop.f32.mrf.mxu0
  %v344 = vadd.f32 %v255, %v343
  %v345 = vpop.f32.mrf.mxu0
  %v346 = vpop.f32.mrf.mxu0
  %v347 = vadd.f32 %v255, %v346
  %v348 = vpop.f32.mrf.mxu0
  %349 = vmatprep.mubr.bf16.mxu0 0
  %350 = vmatmul.mubr.bf16.gmra.mxu0 %v279
  %v351 = vpop.f32.mrf.mxu0
  %v352 = vadd.f32 %v255, %v351
  %v353 = vpop.f32.mrf.mxu0
  %v354 = vpop.f32.mrf.mxu0
  %v355 = vadd.f32 %v255, %v354
  %v356 = vpop.f32.mrf.mxu0
  %357 = vmatprep.mubr.bf16.mxu0 0
  %358 = vmatmul.mubr.bf16.gmra.mxu0 %v282
  %v359 = vpop.f32.mrf.mxu0
  %v360 = vadd.f32 %v255, %v359
  %v361 = vpop.f32.mrf.mxu0
  %v362 = vpop.f32.mrf.mxu0
  %v363 = vadd.f32 %v255, %v362
  %v364 = vpop.f32.mrf.mxu0
  %365 = vmatprep.mubr.bf16.mxu0 0
  %366 = vmatmul.mubr.bf16.gmra.mxu0 %v285
  %v367 = vpop.f32.mrf.mxu0
  %v368 = vadd.f32 %v255, %v367
  %v369 = vpop.f32.mrf.mxu0
  %v370 = vpop.f32.mrf.mxu0
  %v371 = vadd.f32 %v255, %v370
  %v372 = vpop.f32.mrf.mxu0
  %373 = vmatprep.mubr.bf16.mxu0 0
  %374 = vmatmul.mubr.bf16.gmra.mxu0 %v288
  %v375 = vpop.f32.mrf.mxu0
  %v376 = vadd.f32 %v255, %v375
  %v377 = vpop.f32.mrf.mxu0
  %v378 = vpop.f32.mrf.mxu0
  %v379 = vadd.f32 %v255, %v378
  %v380 = vpop.f32.mrf.mxu0
  %381 = vmatprep.mubr.bf16.mxu0 0
  %382 = vmatmul.mubr.bf16.gmra.mxu0 %v291
  %v383 = vpop.f32.mrf.mxu0
  %v384 = vadd.f32 %v255, %v383
  %v385 = vpop.f32.mrf.mxu0
  %v386 = vpop.f32.mrf.mxu0
  %v387 = vadd.f32 %v255, %v386
  %v388 = vpop.f32.mrf.mxu0
  %389 = vdwg.mxu0
  %v390 = vpack.c.bf16 %v331, %v328
  %v391 = vpack.c.bf16 %v339, %v336
  %v392 = vpack.c.bf16 %v347, %v344
  %v393 = vpack.c.bf16 %v355, %v352
  %v394 = vpack.c.bf16 %v363, %v360
  %v395 = vpack.c.bf16 %v371, %v368
  %v396 = vpack.c.bf16 %v379, %v376
  %v397 = vpack.c.bf16 %v387, %v384
  %v399 = vsel %vm100, %v390, 0
  %v402 = vsel %vm100, %v391, 0
  %v405 = vsel %vm100, %v392, 0
  %v408 = vsel %vm100, %v393, 0
  %v411 = vsel %vm100, %v394, 0
  %v414 = vsel %vm100, %v395, 0
  %v417 = vsel %vm100, %v396, 0
  %v420 = vsel %vm100, %v397, 0
  %422 = vmatprep.subr.bf16.mxu0 0
  %423 = vmatpush1.bf16.xpose.msra.mxu0 %v420
  %424 = vmatprep.subr.bf16.mxu0 0
  %425 = vmatpush1.bf16.xpose.msra.mxu0 %v417
  %426 = vmatprep.subr.bf16.mxu0 0
  %427 = vmatpush1.bf16.xpose.msra.mxu0 %v414
  %428 = vmatprep.subr.bf16.mxu0 0
  %429 = vmatpush1.bf16.xpose.msra.mxu0 %v411
  %430 = vmatprep.subr.bf16.mxu0 0
  %431 = vmatpush1.bf16.xpose.msra.mxu0 %v408
  %432 = vmatprep.subr.bf16.mxu0 0
  %433 = vmatpush1.bf16.xpose.msra.mxu0 %v405
  %434 = vmatprep.subr.bf16.mxu0 0
  %435 = vmatpush1.bf16.xpose.msra.mxu0 %v402
  %436 = vmatprep.subr.bf16.mxu0 0
  %437 = vmatpush1.bf16.xpose.msra.mxu0 %v399
  %438 = vmatprep.subr.bf16.mxu0 0
  %439 = vmatpush2.bf16.xpose.msra.mxu0 0
  %440 = vmatprep.subr.bf16.mxu0 0
  %441 = vmatpush2.bf16.xpose.msra.mxu0 0
  %442 = vmatprep.subr.bf16.mxu0 0
  %443 = vmatpush2.bf16.xpose.msra.mxu0 0
  %444 = vmatprep.subr.bf16.mxu0 0
  %445 = vmatpush2.bf16.xpose.msra.mxu0 0
  %446 = vmatprep.subr.bf16.mxu0 0
  %447 = vmatpush2.bf16.xpose.msra.mxu0 0
  %448 = vmatprep.subr.bf16.mxu0 0
  %449 = vmatpush2.bf16.xpose.msra.mxu0 0
  %450 = vmatprep.subr.bf16.mxu0 0
  %451 = vmatpush2.bf16.xpose.msra.mxu0 0
  %452 = vmatprep.subr.bf16.mxu0 0
  %453 = vmatpush2.bf16.xpose.msra.mxu0 0
  %454 = vmatprep.mubr.bf16.mxu0 0
  %455 = vmatmul.mubr.bf16.gmra.mxu0 %v399
  %v456 = vpop.f32.mrf.mxu0
  %v457 = vadd.f32 0.0, %v456
  %v458 = vpop.f32.mrf.mxu0
  %v459 = vpop.f32.mrf.mxu0
  %v460 = vadd.f32 0.0, %v459
  %v461 = vpop.f32.mrf.mxu0
  %462 = vmatprep.mubr.bf16.mxu0 0
  %463 = vmatmul.mubr.bf16.gmra.mxu0 %v402
  %v464 = vpop.f32.mrf.mxu0
  %v465 = vadd.f32 0.0, %v464
  %v466 = vpop.f32.mrf.mxu0
  %v467 = vpop.f32.mrf.mxu0
  %v468 = vadd.f32 0.0, %v467
  %v469 = vpop.f32.mrf.mxu0
  %470 = vmatprep.mubr.bf16.mxu0 0
  %471 = vmatmul.mubr.bf16.gmra.mxu0 %v405
  %v472 = vpop.f32.mrf.mxu0
  %v473 = vadd.f32 0.0, %v472
  %v474 = vpop.f32.mrf.mxu0
  %v475 = vpop.f32.mrf.mxu0
  %v476 = vadd.f32 0.0, %v475
  %v477 = vpop.f32.mrf.mxu0
  %478 = vmatprep.mubr.bf16.mxu0 0
  %479 = vmatmul.mubr.bf16.gmra.mxu0 %v408
  %v480 = vpop.f32.mrf.mxu0
  %v481 = vadd.f32 0.0, %v480
  %v482 = vpop.f32.mrf.mxu0
  %v483 = vpop.f32.mrf.mxu0
  %v484 = vadd.f32 0.0, %v483
  %v485 = vpop.f32.mrf.mxu0
  %486 = vmatprep.mubr.bf16.mxu0 0
  %487 = vmatmul.mubr.bf16.gmra.mxu0 %v411
  %v488 = vpop.f32.mrf.mxu0
  %v489 = vadd.f32 0.0, %v488
  %v490 = vpop.f32.mrf.mxu0
  %v491 = vpop.f32.mrf.mxu0
  %v492 = vadd.f32 0.0, %v491
  %v493 = vpop.f32.mrf.mxu0
  %494 = vmatprep.mubr.bf16.mxu0 0
  %495 = vmatmul.mubr.bf16.gmra.mxu0 %v414
  %v496 = vpop.f32.mrf.mxu0
  %v497 = vadd.f32 0.0, %v496
  %v498 = vpop.f32.mrf.mxu0
  %v499 = vpop.f32.mrf.mxu0
  %v500 = vadd.f32 0.0, %v499
  %v501 = vpop.f32.mrf.mxu0
  %502 = vmatprep.mubr.bf16.mxu0 0
  %503 = vmatmul.mubr.bf16.gmra.mxu0 %v417
  %v504 = vpop.f32.mrf.mxu0
  %v505 = vadd.f32 0.0, %v504
  %v506 = vpop.f32.mrf.mxu0
  %v507 = vpop.f32.mrf.mxu0
  %v508 = vadd.f32 0.0, %v507
  %v509 = vpop.f32.mrf.mxu0
  %510 = vmatprep.mubr.bf16.mxu0 0
  %511 = vmatmul.mubr.bf16.gmra.mxu0 %v420
  %v512 = vpop.f32.mrf.mxu0
  %v513 = vadd.f32 0.0, %v512
  %v514 = vpop.f32.mrf.mxu0
  %v515 = vpop.f32.mrf.mxu0
  %v516 = vadd.f32 0.0, %v515
  %v517 = vpop.f32.mrf.mxu0
  %518 = vdwg.mxu0
  %v519 = vlaneseq
  %v520 = vand.u32 %v519, 127
  %vm521 = vcmp.lt.s32.totalorder %v520, 8
  %v522 = vsel %vm521, %v457, -1e+30
  %v523 = vsel %vm521, %v460, -1e+30
  %v524 = vsel %vm521, %v465, -1e+30
  %v525 = vsel %vm521, %v468, -1e+30
  %v526 = vsel %vm521, %v473, -1e+30
  %v527 = vsel %vm521, %v476, -1e+30
  %v528 = vsel %vm521, %v481, -1e+30
  %v529 = vsel %vm521, %v484, -1e+30
  %v530 = vsel %vm521, %v489, -1e+30
  %v531 = vsel %vm521, %v492, -1e+30
  %v532 = vsel %vm521, %v497, -1e+30
  %v533 = vsel %vm521, %v500, -1e+30
  %v534 = vsel %vm521, %v505, -1e+30
  %v535 = vsel %vm521, %v508, -1e+30
  %v536 = vsel %vm521, %v513, -1e+30
  %v537 = vsel %vm521, %v516, -1e+30
  %538 = vmax.xlane.f32.xlu0 %v522
  %v539 = vpop.xlane.xlu0 %538
  %540 = vmax.xlane.f32.xlu0 %v523
  %v541 = vpop.xlane.xlu0 %540
  %542 = vmax.xlane.f32.xlu0 %v524
  %v543 = vpop.xlane.xlu0 %542
  %544 = vmax.xlane.f32.xlu0 %v525
  %v545 = vpop.xlane.xlu0 %544
  %546 = vmax.xlane.f32.xlu0 %v526
  %v547 = vpop.xlane.xlu0 %546
  %548 = vmax.xlane.f32.xlu0 %v527
  %v549 = vpop.xlane.xlu0 %548
  %550 = vmax.xlane.f32.xlu0 %v528
  %v551 = vpop.xlane.xlu0 %550
  %552 = vmax.xlane.f32.xlu0 %v529
  %v553 = vpop.xlane.xlu0 %552
  %554 = vmax.xlane.f32.xlu0 %v530
  %v555 = vpop.xlane.xlu0 %554
  %556 = vmax.xlane.f32.xlu0 %v531
  %v557 = vpop.xlane.xlu0 %556
  %558 = vmax.xlane.f32.xlu0 %v532
  %v559 = vpop.xlane.xlu0 %558
  %560 = vmax.xlane.f32.xlu0 %v533
  %v561 = vpop.xlane.xlu0 %560
  %562 = vmax.xlane.f32.xlu0 %v534
  %v563 = vpop.xlane.xlu0 %562
  %564 = vmax.xlane.f32.xlu0 %v535
  %v565 = vpop.xlane.xlu0 %564
  %566 = vmax.xlane.f32.xlu0 %v536
  %v567 = vpop.xlane.xlu0 %566
  %568 = vmax.xlane.f32.xlu0 %v537
  %v569 = vpop.xlane.xlu0 %568
  %v570 = vsub.f32 %v522, %v539
  %v571 = vsub.f32 %v523, %v541
  %v572 = vsub.f32 %v524, %v543
  %v573 = vsub.f32 %v525, %v545
  %v574 = vsub.f32 %v526, %v547
  %v575 = vsub.f32 %v527, %v549
  %v576 = vsub.f32 %v528, %v551
  %v577 = vsub.f32 %v529, %v553
  %v578 = vsub.f32 %v530, %v555
  %v579 = vsub.f32 %v531, %v557
  %v580 = vsub.f32 %v532, %v559
  %v581 = vsub.f32 %v533, %v561
  %v582 = vsub.f32 %v534, %v563
  %v583 = vsub.f32 %v535, %v565
  %v584 = vsub.f32 %v536, %v567
  %v585 = vsub.f32 %v537, %v569
  %v586 = vmul.f32 %v570, 1.442695
  %v587 = vpow.pop %v586
  %v588 = vmul.f32 %v571, 1.442695
  %v589 = vpow.pop %v588
  %v590 = vmul.f32 %v572, 1.442695
  %v591 = vpow.pop %v590
  %v592 = vmul.f32 %v573, 1.442695
  %v593 = vpow.pop %v592
  %v594 = vmul.f32 %v574, 1.442695
  %v595 = vpow.pop %v594
  %v596 = vmul.f32 %v575, 1.442695
  %v597 = vpow.pop %v596
  %v598 = vmul.f32 %v576, 1.442695
  %v599 = vpow.pop %v598
  %v600 = vmul.f32 %v577, 1.442695
  %v601 = vpow.pop %v600
  %v602 = vmul.f32 %v578, 1.442695
  %v603 = vpow.pop %v602
  %v604 = vmul.f32 %v579, 1.442695
  %v605 = vpow.pop %v604
  %v606 = vmul.f32 %v580, 1.442695
  %v607 = vpow.pop %v606
  %v608 = vmul.f32 %v581, 1.442695
  %v609 = vpow.pop %v608
  %v610 = vmul.f32 %v582, 1.442695
  %v611 = vpow.pop %v610
  %v612 = vmul.f32 %v583, 1.442695
  %v613 = vpow.pop %v612
  %v614 = vmul.f32 %v584, 1.442695
  %v615 = vpow.pop %v614
  %v616 = vmul.f32 %v585, 1.442695
  %v617 = vpow.pop %v616
  %618 = vadd.xlane.f32.xlu0 %v587
  %v619 = vpop.xlane.xlu0 %618
  %620 = vadd.xlane.f32.xlu0 %v589
  %v621 = vpop.xlane.xlu0 %620
  %622 = vadd.xlane.f32.xlu0 %v591
  %v623 = vpop.xlane.xlu0 %622
  %624 = vadd.xlane.f32.xlu0 %v593
  %v625 = vpop.xlane.xlu0 %624
  %626 = vadd.xlane.f32.xlu0 %v595
  %v627 = vpop.xlane.xlu0 %626
  %628 = vadd.xlane.f32.xlu0 %v597
  %v629 = vpop.xlane.xlu0 %628
  %630 = vadd.xlane.f32.xlu0 %v599
  %v631 = vpop.xlane.xlu0 %630
  %632 = vadd.xlane.f32.xlu0 %v601
  %v633 = vpop.xlane.xlu0 %632
  %634 = vadd.xlane.f32.xlu0 %v603
  %v635 = vpop.xlane.xlu0 %634
  %636 = vadd.xlane.f32.xlu0 %v605
  %v637 = vpop.xlane.xlu0 %636
  %638 = vadd.xlane.f32.xlu0 %v607
  %v639 = vpop.xlane.xlu0 %638
  %640 = vadd.xlane.f32.xlu0 %v609
  %v641 = vpop.xlane.xlu0 %640
  %642 = vadd.xlane.f32.xlu0 %v611
  %v643 = vpop.xlane.xlu0 %642
  %644 = vadd.xlane.f32.xlu0 %v613
  %v645 = vpop.xlane.xlu0 %644
  %646 = vadd.xlane.f32.xlu0 %v615
  %v647 = vpop.xlane.xlu0 %646
  %648 = vadd.xlane.f32.xlu0 %v617
  %v649 = vpop.xlane.xlu0 %648
  %v650 = vrcp.pop %v619
  %v651 = vrcp.pop %v621
  %v652 = vrcp.pop %v623
  %v653 = vrcp.pop %v625
  %v654 = vrcp.pop %v627
  %v655 = vrcp.pop %v629
  %v656 = vrcp.pop %v631
  %v657 = vrcp.pop %v633
  %v658 = vrcp.pop %v635
  %v659 = vrcp.pop %v637
  %v660 = vrcp.pop %v639
  %v661 = vrcp.pop %v641
  %v662 = vrcp.pop %v643
  %v663 = vrcp.pop %v645
  %v664 = vrcp.pop %v647
  %v665 = vrcp.pop %v649
  %v666 = vmul.f32 %v587, %v650
  %v667 = vmul.f32 %v589, %v651
  %v668 = vmul.f32 %v591, %v652
  %v669 = vmul.f32 %v593, %v653
  %v670 = vmul.f32 %v595, %v654
  %v671 = vmul.f32 %v597, %v655
  %v672 = vmul.f32 %v599, %v656
  %v673 = vmul.f32 %v601, %v657
  %v674 = vmul.f32 %v603, %v658
  %v675 = vmul.f32 %v605, %v659
  %v676 = vmul.f32 %v607, %v660
  %v677 = vmul.f32 %v609, %v661
  %v678 = vmul.f32 %v611, %v662
  %v679 = vmul.f32 %v613, %v663
  %v680 = vmul.f32 %v615, %v664
  %v681 = vmul.f32 %v617, %v665
  %v682 = vpack.c.bf16 %v667, %v666
  %v683 = vpack.c.bf16 %v669, %v668
  %v684 = vpack.c.bf16 %v671, %v670
  %v685 = vpack.c.bf16 %v673, %v672
  %v686 = vpack.c.bf16 %v675, %v674
  %v687 = vpack.c.bf16 %v677, %v676
  %v688 = vpack.c.bf16 %v679, %v678
  %v689 = vpack.c.bf16 %v681, %v680
  %v698 = vunpack.c.l.b16 %v682
  %v699 = vunpack.c.h.b16 %v682
  %v700 = vunpack.c.l.b16 %v683
  %v701 = vunpack.c.h.b16 %v683
  %v702 = vunpack.c.l.b16 %v684
  %v703 = vunpack.c.h.b16 %v684
  %v704 = vunpack.c.l.b16 %v685
  %v705 = vunpack.c.h.b16 %v685
  %v706 = vunpack.c.l.b16 %v686
  %v707 = vunpack.c.h.b16 %v686
  %v708 = vunpack.c.l.b16 %v687
  %v709 = vunpack.c.h.b16 %v687
  %v710 = vunpack.c.l.b16 %v688
  %v711 = vunpack.c.h.b16 %v688
  %v712 = vunpack.c.l.b16 %v689
  %v713 = vunpack.c.h.b16 %v689
  %v714 = vpack.c.b16 %v698, %v698
  %v715 = vpack.c.b16 %v699, %v699
  %v716 = vpack.c.b16 %v700, %v700
  %v717 = vpack.c.b16 %v701, %v701
  %v718 = vpack.c.b16 %v702, %v702
  %v719 = vpack.c.b16 %v703, %v703
  %v720 = vpack.c.b16 %v704, %v704
  %v721 = vpack.c.b16 %v705, %v705
  %v722 = vpack.c.b16 %v706, %v706
  %v723 = vpack.c.b16 %v707, %v707
  %v724 = vpack.c.b16 %v708, %v708
  %v725 = vpack.c.b16 %v709, %v709
  %v726 = vpack.c.b16 %v710, %v710
  %v727 = vpack.c.b16 %v711, %v711
  %v728 = vpack.c.b16 %v712, %v712
  %v729 = vpack.c.b16 %v713, %v713
  %746 = vst [vmem:[%s5] sm:$0xf] %v714
  %747 = vst [vmem:[%s5 + $0x4] sm:$0xf] %v715
  %748 = vst [vmem:[%s5 + $0x8] sm:$0xf] %v716
  %749 = vst [vmem:[%s5 + $0xc] sm:$0xf] %v717
  %750 = vst [vmem:[%s5 + $0x10] sm:$0xf] %v718
  %751 = vst [vmem:[%s5 + $0x14] sm:$0xf] %v719
  %752 = vst [vmem:[%s5 + $0x18] sm:$0xf] %v720
  %753 = vst [vmem:[%s5 + $0x1c] sm:$0xf] %v721
  %754 = vst [vmem:[%s5 + $0x20] sm:$0xf] %v722
  %755 = vst [vmem:[%s5 + $0x24] sm:$0xf] %v723
  %756 = vst [vmem:[%s5 + $0x28] sm:$0xf] %v724
  %757 = vst [vmem:[%s5 + $0x2c] sm:$0xf] %v725
  %758 = vst [vmem:[%s5 + $0x30] sm:$0xf] %v726
  %759 = vst [vmem:[%s5 + $0x34] sm:$0xf] %v727
  %760 = vst [vmem:[%s5 + $0x38] sm:$0xf] %v728
  %761 = vst [vmem:[%s5 + $0x3c] sm:$0xf] %v729
  // Predicated region
  $region22: #{diffusivity_transform.1} parent=0 // pred_check
    _
  $region23: #{diffusivity_transform.1} parent=0 // pred_check_branch
    %763 = sbr.rel (0) target = $region25
  $region24: #{diffusivity_transform.1} parent=0 // pred_region
    _
  $region25: #{diffusivity_transform.1} parent=0 // pred_fallthru
    _
  // Predicated region
  $region26: #{diffusivity_transform.1} parent=0 // pred_check
    _
  $region27: #{diffusivity_transform.1} parent=0 // pred_check_branch
    %765 = sbr.rel (0) target = $region29
  $region28: #{diffusivity_transform.1} parent=0 // pred_region
    _
  $region29: #{diffusivity_transform.1} parent=0 // pred_fallthru
    _

</llo_original>
